<compile_context>
chip_gen: v5e
topology: v5e:2x2
jax: 0.10.0
libtpu: 0.0.40
codegen_flags: <defaults>
</compile_context>

<pallas_src>
import jax
import jax.numpy as jnp
from jax.experimental import pallas as pl
from jax.experimental.pallas import tpu as pltpu

# ---------------------------------------------------------------------------
# Model hyper-parameters (small, consistent with the module's __init__).
# ---------------------------------------------------------------------------
BATCH = 2
SEQ = 8
EMBED_DIM = 32                                   # gte hidden_size
SHARED_HIDDEN = int(EMBED_DIM * 0.5)             # 16
HEAD_HIDDEN = int(EMBED_DIM * 0.25)              # 8
NUM_ESG = 4
NUM_E_SUB = 5
NUM_S_SUB = 6
NUM_G_SUB = 3
LN_EPS = 1e-5                                    # PyTorch nn.LayerNorm default

NUM_HEADS = 4
CLASS_SIZES = (NUM_ESG, NUM_E_SUB, NUM_S_SUB, NUM_G_SUB)
CLASS_OFFSETS = tuple(sum(CLASS_SIZES[:i]) for i in range(NUM_HEADS))   # (0,4,9,15)
TOTAL_CLASSES = sum(CLASS_SIZES)                                        # 18

LANES = 128                                      # lane-dense width for everything

# --- packed parameter buffer row layout (all rows are 128 lanes wide) -------
R_SPW = 0                          # EMBED_DIM rows : shared Linear W (32x16 in cols 0:16)
R_SPB = R_SPW + EMBED_DIM          # 1 row : shared Linear bias
R_SPG = R_SPB + 1                  # 1 row : shared LayerNorm gamma
R_SPBE = R_SPG + 1                 # 1 row : shared LayerNorm beta
R_W1 = R_SPBE + 1                  # LANES rows : fused head W1 (16x32 in top-left)
R_B1 = R_W1 + LANES                # 1 row : fused head b1      (cols 0:32)
R_G1 = R_B1 + 1                    # 1 row : fused head LN gamma (cols 0:32)
R_BE1 = R_G1 + 1                   # 1 row : fused head LN beta  (cols 0:32)
R_SEG = R_BE1 + 1                  # LANES rows : block-diag segment-averaging matrix
R_W2 = R_SEG + LANES               # LANES rows : block-diag fused W2 (32x18 in top-left)
R_B2 = R_W2 + LANES                # 1 row : fused b2 (cols 0:18)
N_ROWS = R_B2 + 1                  # 423


# ---------------------------------------------------------------------------
# Pallas kernel: clamp + shared projector + 4 fused classification heads.
# ---------------------------------------------------------------------------
def mtl_kernel(lhs_ref, p_ref, out_ref):
    # CLS token (static slice of the backbone output) + clamp.
    x = jnp.clip(lhs_ref[:, 0, :], -100.0, 100.0)            # (B, D)

    lane = jax.lax.broadcasted_iota(jnp.int32, (1, LANES), 1)

    # ---- shared projector: Linear -> LayerNorm(16) -> ReLU (dropout = id) ----
    sp_w = p_ref[R_SPW:R_SPW + EMBED_DIM, :]                  # (D, 128), cols 16: zero
    sp_b = p_ref[R_SPB:R_SPB + 1, :]
    sp_g = p_ref[R_SPG:R_SPG + 1, :]
    sp_be = p_ref[R_SPBE:R_SPBE + 1, :]

    s_pre = jnp.dot(x, sp_w, preferred_element_type=jnp.float32) + sp_b   # (B,128)
    # padded lanes of s_pre are exactly 0, so sum/16 is the true mean.
    s_mean = jnp.sum(s_pre, axis=-1, keepdims=True) * (1.0 / SHARED_HIDDEN)
    s_cent = jnp.where(lane < SHARED_HIDDEN, s_pre - s_mean, 0.0)
    s_var = jnp.sum(s_cent * s_cent, axis=-1, keepdims=True) * (1.0 / SHARED_HIDDEN)
    shared = jnp.maximum(
        s_cent * jax.lax.rsqrt(s_var + LN_EPS) * sp_g + sp_be, 0.0)       # (B,128)

    # ---- 4 fused heads: Linear -> per-head LayerNorm(8) -> ReLU -> Linear ----
    w1 = p_ref[R_W1:R_W1 + LANES, :]                          # (128,128)
    b1 = p_ref[R_B1:R_B1 + 1, :]
    g1 = p_ref[R_G1:R_G1 + 1, :]
    be1 = p_ref[R_BE1:R_BE1 + 1, :]
    seg = p_ref[R_SEG:R_SEG + LANES, :]                       # block-diag 1/8 averaging

    h_pre = jnp.dot(shared, w1, preferred_element_type=jnp.float32) + b1  # heads in cols 0:32
    # per-8-wide-segment mean/variance via the averaging matmul (MXU, no reshapes)
    h_mean = jnp.dot(h_pre, seg, preferred_element_type=jnp.float32)
    h_cent = h_pre - h_mean                                   # padded lanes stay exactly 0
    h_var = jnp.dot(h_cent * h_cent, seg, preferred_element_type=jnp.float32)
    h = jnp.maximum(
        h_cent * jax.lax.rsqrt(h_var + LN_EPS) * g1 + be1, 0.0)

    # block-diagonal output projection -> one lane-dense logits slab
    w2 = p_ref[R_W2:R_W2 + LANES, :]
    b2 = p_ref[R_B2:R_B2 + 1, :]
    logits = jnp.dot(h, w2, preferred_element_type=jnp.float32) + b2      # (B,128)
    out_ref[...] = logits.astype(out_ref.dtype)


# ---------------------------------------------------------------------------
# Parameter init: Xavier-normal weights, zero biases, LayerNorm gamma=1 beta=0.
# ---------------------------------------------------------------------------
def xavier_normal(key, fan_in, fan_out):
    std = (2.0 / (fan_in + fan_out)) ** 0.5
    # stored as (in, out) so math is x @ W + b
    return std * jax.random.normal(key, (fan_in, fan_out), dtype=jnp.float32)


def make_params(key):
    keys = jax.random.split(key, 16)
    ki = iter(keys)

    def linear(fan_in, fan_out):
        w = xavier_normal(next(ki), fan_in, fan_out)
        b = jnp.zeros((1, fan_out), jnp.float32)
        return w, b

    def layernorm_params(n):
        return jnp.ones((1, n), jnp.float32), jnp.zeros((1, n), jnp.float32)

    params = []
    sp_w, sp_b = linear(EMBED_DIM, SHARED_HIDDEN)
    sp_g, sp_be = layernorm_params(SHARED_HIDDEN)
    params += [sp_w, sp_b, sp_g, sp_be]
    for n_cls in CLASS_SIZES:
        w1, b1 = linear(SHARED_HIDDEN, HEAD_HIDDEN)
        g1, be1 = layernorm_params(HEAD_HIDDEN)
        w2, b2 = linear(HEAD_HIDDEN, n_cls)
        params += [w1, b1, g1, be1, w2, b2]
    return params


def pack_params(params):
    """Pack all 28 param tensors into ONE (N_ROWS, 128) f32 buffer (done once)."""
    sp_w, sp_b, sp_g, sp_be = params[0:4]
    buf = jnp.zeros((N_ROWS, LANES), jnp.float32)
    buf = buf.at[R_SPW:R_SPW + EMBED_DIM, :SHARED_HIDDEN].set(sp_w)
    buf = buf.at[R_SPB, :SHARED_HIDDEN].set(sp_b[0])
    buf = buf.at[R_SPG, :SHARED_HIDDEN].set(sp_g[0])
    buf = buf.at[R_SPBE, :SHARED_HIDDEN].set(sp_be[0])

    # block-diagonal segment-averaging matrix (each 8x8 block = 1/8)
    seg = jnp.zeros((LANES, LANES), jnp.float32)
    for i in range(NUM_HEADS):
        h0 = i * HEAD_HIDDEN
        seg = seg.at[h0:h0 + HEAD_HIDDEN, h0:h0 + HEAD_HIDDEN].set(1.0 / HEAD_HIDDEN)
    buf = buf.at[R_SEG:R_SEG + LANES, :].set(seg)

    for i in range(NUM_HEADS):
        w1, b1, g1, be1, w2, b2 = params[4 + 6 * i: 4 + 6 * (i + 1)]
        h0 = i * HEAD_HIDDEN
        c0, n_cls = CLASS_OFFSETS[i], CLASS_SIZES[i]
        buf = buf.at[R_W1:R_W1 + SHARED_HIDDEN, h0:h0 + HEAD_HIDDEN].set(w1)
        buf = buf.at[R_B1, h0:h0 + HEAD_HIDDEN].set(b1[0])
        buf = buf.at[R_G1, h0:h0 + HEAD_HIDDEN].set(g1[0])
        buf = buf.at[R_BE1, h0:h0 + HEAD_HIDDEN].set(be1[0])
        buf = buf.at[R_W2 + h0:R_W2 + h0 + HEAD_HIDDEN, c0:c0 + n_cls].set(w2)
        buf = buf.at[R_B2, c0:c0 + n_cls].set(b2[0])
    return buf


# ---------------------------------------------------------------------------
# Wrapper: single pallas_call, slice the 4 logit groups from the output slab.
# ---------------------------------------------------------------------------
@jax.jit
def hierarchical_mtl_forward(last_hidden_state, packed_params):
    vmem = pltpu.MemorySpace.VMEM
    slab = pl.pallas_call(
        mtl_kernel,
        out_shape=jax.ShapeDtypeStruct((BATCH, LANES), jnp.float32),
        in_specs=[pl.BlockSpec(memory_space=vmem),
                  pl.BlockSpec(memory_space=vmem)],
        out_specs=pl.BlockSpec(memory_space=vmem),
    )(last_hidden_state, packed_params)
    return tuple(slab[:, off:off + n] for off, n in zip(CLASS_OFFSETS, CLASS_SIZES))


# ---------------------------------------------------------------------------
# Pure-JAX reference for sanity checking (per-head, un-fused, natural params).
# ---------------------------------------------------------------------------
def reference_forward(last_hidden_state, params):
    def ln(x, g, b):
        m = jnp.mean(x, axis=-1, keepdims=True)
        v = jnp.mean((x - m) ** 2, axis=-1, keepdims=True)
        return (x - m) / jnp.sqrt(v + LN_EPS) * g + b

    cls = jnp.clip(last_hidden_state[:, 0, :], -100.0, 100.0)
    sp_w, sp_b, sp_g, sp_be = params[0:4]
    shared = jnp.maximum(ln(cls @ sp_w + sp_b, sp_g, sp_be), 0.0)
    outs = []
    for i in range(NUM_HEADS):
        w1, b1, g1, be1, w2, b2 = params[4 + 6 * i: 4 + 6 * (i + 1)]
        h = jnp.maximum(ln(shared @ w1 + b1, g1, be1), 0.0)
        outs.append(h @ w2 + b2)
    return tuple(outs)


if __name__ == "__main__":
    key = jax.random.PRNGKey(0)
    k_x, k_p = jax.random.split(key)

    # synthetic backbone output: last_hidden_state (B, S, D)
    last_hidden_state = jax.random.normal(
        k_x, (BATCH, SEQ, EMBED_DIM), dtype=jnp.float32) * 50.0
    params = make_params(k_p)
    packed = pack_params(params)           # packed ONCE, outside the jit'd forward

    outs = hierarchical_mtl_forward(last_hidden_state, packed)
    outs = jax.block_until_ready(outs)

    refs = reference_forward(last_hidden_state, params)
    for o, r in zip(outs, refs):
        assert o.shape == r.shape
        assert float(jnp.max(jnp.abs(o - r))) < 1e-4, "mismatch vs reference"

    print("KERNEL_OK")
</pallas_src>

<mosaic_0001>
module attributes {stable_mosaic.version = 11 : i64} {
  func.func @mtl_kernel(%arg0: memref<2x8x32xf32, #tpu.memory_space<vmem>>, %arg1: memref<423x128xf32, #tpu.memory_space<vmem>>, %arg2: memref<2x128xf32, #tpu.memory_space<vmem>>) attributes {dimension_semantics = [], scalar_prefetch = 0 : i64, scratch_operands = 0 : i64, tpu.core_type = #tpu.core_type<tc>} {
    %c0 = arith.constant 0 : index
    %c0_0 = arith.constant 0 : index
    %c0_1 = arith.constant 0 : index
    %0 = vector.load %arg0[%c0, %c0_0, %c0_1] : memref<2x8x32xf32, #tpu.memory_space<vmem>>, vector<2x1x32xf32>
    %1 = vector.shape_cast %0 : vector<2x1x32xf32> to vector<2x32xf32>
    %cst = arith.constant -1.000000e+02 : f32
    %cst_2 = arith.constant 1.000000e+02 : f32
    %2 = vector.broadcast %cst : f32 to vector<2x32xf32>
    %3 = arith.maximumf %2, %1 : vector<2x32xf32>
    %4 = vector.broadcast %cst_2 : f32 to vector<2x32xf32>
    %5 = arith.minimumf %4, %3 : vector<2x32xf32>
    %6 = tpu.iota {dimensions = array<i32: 1>} : vector<1x128xi32>
    %c0_3 = arith.constant 0 : index
    %c0_4 = arith.constant 0 : index
    %7 = vector.load %arg1[%c0_3, %c0_4] : memref<423x128xf32, #tpu.memory_space<vmem>>, vector<32x128xf32>
    %c32 = arith.constant 32 : index
    %c0_5 = arith.constant 0 : index
    %8 = vector.load %arg1[%c32, %c0_5] : memref<423x128xf32, #tpu.memory_space<vmem>>, vector<1x128xf32>
    %c33 = arith.constant 33 : index
    %c0_6 = arith.constant 0 : index
    %9 = vector.load %arg1[%c33, %c0_6] : memref<423x128xf32, #tpu.memory_space<vmem>>, vector<1x128xf32>
    %c34 = arith.constant 34 : index
    %c0_7 = arith.constant 0 : index
    %10 = vector.load %arg1[%c34, %c0_7] : memref<423x128xf32, #tpu.memory_space<vmem>>, vector<1x128xf32>
    %cst_8 = arith.constant dense<0.000000e+00> : vector<2x128xf32>
    %11 = tpu.matmul %5, %7, %cst_8 {dimension_numbers = #tpu.dot_dimension_numbers<[1], [0], [0], [1], [0, 0, 1, 1], [], []>} : vector<2x32xf32>, vector<32x128xf32>, vector<2x128xf32> -> vector<2x128xf32>
    %12 = vector.broadcast %8 : vector<1x128xf32> to vector<2x128xf32>
    %13 = arith.addf %11, %12 : vector<2x128xf32>
    %cst_9 = arith.constant dense<0.000000e+00> : vector<2xf32>
    %14 = vector.multi_reduction <add>, %13, %cst_9 [1] : vector<2x128xf32> to vector<2xf32>
    %15 = vector.shape_cast %14 : vector<2xf32> to vector<2x1xf32>
    %cst_10 = arith.constant 6.250000e-02 : f32
    %16 = vector.broadcast %cst_10 : f32 to vector<2x1xf32>
    %17 = arith.mulf %15, %16 : vector<2x1xf32>
    %c16_i32 = arith.constant 16 : i32
    %18 = vector.broadcast %c16_i32 : i32 to vector<1x128xi32>
    %19 = arith.cmpi slt, %6, %18 : vector<1x128xi32>
    %20 = vector.broadcast %17 : vector<2x1xf32> to vector<2x128xf32>
    %21 = arith.subf %13, %20 : vector<2x128xf32>
    %cst_11 = arith.constant 0.000000e+00 : f32
    %22 = vector.shape_cast %19 : vector<1x128xi1> to vector<1x128xi1>
    %23 = vector.broadcast %22 : vector<1x128xi1> to vector<2x128xi1>
    %24 = vector.broadcast %cst_11 : f32 to vector<2x128xf32>
    %25 = arith.select %23, %21, %24 : vector<2x128xi1>, vector<2x128xf32>
    %26 = arith.mulf %25, %25 : vector<2x128xf32>
    %cst_12 = arith.constant dense<0.000000e+00> : vector<2xf32>
    %27 = vector.multi_reduction <add>, %26, %cst_12 [1] : vector<2x128xf32> to vector<2xf32>
    %28 = vector.shape_cast %27 : vector<2xf32> to vector<2x1xf32>
    %cst_13 = arith.constant 6.250000e-02 : f32
    %29 = vector.broadcast %cst_13 : f32 to vector<2x1xf32>
    %30 = arith.mulf %28, %29 : vector<2x1xf32>
    %cst_14 = arith.constant 9.99999974E-6 : f32
    %31 = vector.broadcast %cst_14 : f32 to vector<2x1xf32>
    %32 = arith.addf %30, %31 : vector<2x1xf32>
    %33 = math.rsqrt %32 : vector<2x1xf32>
    %34 = vector.broadcast %33 : vector<2x1xf32> to vector<2x128xf32>
    %35 = arith.mulf %25, %34 : vector<2x128xf32>
    %36 = vector.broadcast %9 : vector<1x128xf32> to vector<2x128xf32>
    %37 = arith.mulf %35, %36 : vector<2x128xf32>
    %38 = vector.broadcast %10 : vector<1x128xf32> to vector<2x128xf32>
    %39 = arith.addf %37, %38 : vector<2x128xf32>
    %cst_15 = arith.constant 0.000000e+00 : f32
    %40 = vector.broadcast %cst_15 : f32 to vector<2x128xf32>
    %41 = arith.maximumf %39, %40 : vector<2x128xf32>
    %c35 = arith.constant 35 : index
    %c0_16 = arith.constant 0 : index
    %42 = vector.load %arg1[%c35, %c0_16] : memref<423x128xf32, #tpu.memory_space<vmem>>, vector<128x128xf32>
    %c163 = arith.constant 163 : index
    %c0_17 = arith.constant 0 : index
    %43 = vector.load %arg1[%c163, %c0_17] : memref<423x128xf32, #tpu.memory_space<vmem>>, vector<1x128xf32>
    %c164 = arith.constant 164 : index
    %c0_18 = arith.constant 0 : index
    %44 = vector.load %arg1[%c164, %c0_18] : memref<423x128xf32, #tpu.memory_space<vmem>>, vector<1x128xf32>
    %c165 = arith.constant 165 : index
    %c0_19 = arith.constant 0 : index
    %45 = vector.load %arg1[%c165, %c0_19] : memref<423x128xf32, #tpu.memory_space<vmem>>, vector<1x128xf32>
    %c166 = arith.constant 166 : index
    %c0_20 = arith.constant 0 : index
    %46 = vector.load %arg1[%c166, %c0_20] : memref<423x128xf32, #tpu.memory_space<vmem>>, vector<128x128xf32>
    %cst_21 = arith.constant dense<0.000000e+00> : vector<2x128xf32>
    %47 = tpu.matmul %41, %42, %cst_21 {dimension_numbers = #tpu.dot_dimension_numbers<[1], [0], [0], [1], [0, 0, 1, 1], [], []>} : vector<2x128xf32>, vector<128x128xf32>, vector<2x128xf32> -> vector<2x128xf32>
    %48 = vector.broadcast %43 : vector<1x128xf32> to vector<2x128xf32>
    %49 = arith.addf %47, %48 : vector<2x128xf32>
    %cst_22 = arith.constant dense<0.000000e+00> : vector<2x128xf32>
    %50 = tpu.matmul %49, %46, %cst_22 {dimension_numbers = #tpu.dot_dimension_numbers<[1], [0], [0], [1], [0, 0, 1, 1], [], []>} : vector<2x128xf32>, vector<128x128xf32>, vector<2x128xf32> -> vector<2x128xf32>
    %51 = arith.subf %49, %50 : vector<2x128xf32>
    %52 = arith.mulf %51, %51 : vector<2x128xf32>
    %cst_23 = arith.constant dense<0.000000e+00> : vector<2x128xf32>
    %53 = tpu.matmul %52, %46, %cst_23 {dimension_numbers = #tpu.dot_dimension_numbers<[1], [0], [0], [1], [0, 0, 1, 1], [], []>} : vector<2x128xf32>, vector<128x128xf32>, vector<2x128xf32> -> vector<2x128xf32>
    %cst_24 = arith.constant 9.99999974E-6 : f32
    %54 = vector.broadcast %cst_24 : f32 to vector<2x128xf32>
    %55 = arith.addf %53, %54 : vector<2x128xf32>
    %56 = math.rsqrt %55 : vector<2x128xf32>
    %57 = arith.mulf %51, %56 : vector<2x128xf32>
    %58 = vector.broadcast %44 : vector<1x128xf32> to vector<2x128xf32>
    %59 = arith.mulf %57, %58 : vector<2x128xf32>
    %60 = vector.broadcast %45 : vector<1x128xf32> to vector<2x128xf32>
    %61 = arith.addf %59, %60 : vector<2x128xf32>
    %cst_25 = arith.constant 0.000000e+00 : f32
    %62 = vector.broadcast %cst_25 : f32 to vector<2x128xf32>
    %63 = arith.maximumf %61, %62 : vector<2x128xf32>
    %c294 = arith.constant 294 : index
    %c0_26 = arith.constant 0 : index
    %64 = vector.load %arg1[%c294, %c0_26] : memref<423x128xf32, #tpu.memory_space<vmem>>, vector<128x128xf32>
    %c422 = arith.constant 422 : index
    %c0_27 = arith.constant 0 : index
    %65 = vector.load %arg1[%c422, %c0_27] : memref<423x128xf32, #tpu.memory_space<vmem>>, vector<1x128xf32>
    %cst_28 = arith.constant dense<0.000000e+00> : vector<2x128xf32>
    %66 = tpu.matmul %63, %64, %cst_28 {dimension_numbers = #tpu.dot_dimension_numbers<[1], [0], [0], [1], [0, 0, 1, 1], [], []>} : vector<2x128xf32>, vector<128x128xf32>, vector<2x128xf32> -> vector<2x128xf32>
    %67 = vector.broadcast %65 : vector<1x128xf32> to vector<2x128xf32>
    %68 = arith.addf %66, %67 : vector<2x128xf32>
    %c0_29 = arith.constant 0 : index
    %c0_30 = arith.constant 0 : index
    %69 = vector.load %arg2[%c0_29, %c0_30] : memref<2x128xf32, #tpu.memory_space<vmem>>, vector<2x128xf32>
    tpu.vector_store %arg2[%c0_29, %c0_30], %68 {strides = array<i32>} : memref<2x128xf32, #tpu.memory_space<vmem>>, vector<2x128xf32>,
    return
  }
}

</mosaic_0001>

<llo_original>
// kernel: hierarchical_mtl_forward.1
$region0: #{hierarchical_mtl_forward.1}
  #allocation0 [shape = 'u32[]', space=smem, size = 0x4, offset = 0x4, fixed_abs, tag = 'smem constant byte address 0x4 - core index']
  #allocation1 [shape = 'u32[72,128]{1,0:T(1,128)}', space=vmem, size = 0x9000, scoped, tag = 'internal scratch']
  %s0 = inlined_call_operand.hbm [shape: f32[2,8,32], index: 0, kind: input, shape index: {}]
  %s1 = inlined_call_operand.hbm [shape: f32[423,128], index: 1, kind: input, shape index: {}]
  %s2 = inlined_call_operand.vmem [shape: f32[2,128], index: 2, kind: output, shape index: {}]
  %s3 = sld [smem:[#allocation0]]
  $region26: #{hierarchical_mtl_forward.1} parent=0
    _
  %s5 = ssub.s32 1, %s3
  %s6 = scalar_select 0, %s5, %s3
  $region1: #{hierarchical_mtl_forward.1} parent=0
    #allocation2 [shape = 'u8[8192]{0}', space=vmem, size = 0x2000, scoped, tag = 'input window, operand 0, single buffered']
    #allocation3 [shape = 's32[1]{0}', space=sflag, size = 0x4, scoped, tag = 'scoped memory for hierarchical_mtl_forward.1']
    #allocation4 [shape = 'u8[217088]{0}', space=vmem, size = 0x35000, scoped, tag = 'input window, operand 1, single buffered']
    #allocation5 [shape = 's32[1]{0}', space=sflag, size = 0x4, scoped, tag = 'scoped memory for hierarchical_mtl_forward.1']
    %7 = vsyncpa [#allocation3], 0
    %8 = vsyncpa [#allocation5], 0
    // Predicated region
    $region2: #{hierarchical_mtl_forward.1} parent=1 // pred_check
      _
    $region3: #{hierarchical_mtl_forward.1} parent=1 // pred_check_branch
      %10 = sbr.rel (0) target = $region5
    $region4: #{hierarchical_mtl_forward.1} parent=1 // pred_region
      %12 = vsyncadd [#allocation3], 0
      %s13 = sshll.u32 %s0, 4
      %s14 = int_to_ptr.hbm [resolvable:$true] %s13
      %s15 = sshll.u32 [#allocation2], 4
      %s16 = int_to_ptr.vmem [resolvable:$true] %s15
      %21 = dma.hbm_to_vmem [thread:$0]  %s14, 256, %s16, [#allocation3], 128, 128, 8
    $region5: #{hierarchical_mtl_forward.1} parent=1 // pred_fallthru
      _
    // Predicated region
    $region6: #{hierarchical_mtl_forward.1} parent=1 // pred_check
      _
    $region7: #{hierarchical_mtl_forward.1} parent=1 // pred_check_branch
      %23 = sbr.rel (0) target = $region9
    $region8: #{hierarchical_mtl_forward.1} parent=1 // pred_region
      %25 = vsyncadd [#allocation5], 0
      %s26 = sshll.u32 %s1, 4
      %s27 = int_to_ptr.hbm [resolvable:$true] %s26
      %s28 = sshll.u32 [#allocation4], 4
      %s29 = int_to_ptr.vmem [resolvable:$true] %s28
      %34 = dma.hbm_to_vmem [thread:$0]  %s27, 6784, %s29, [#allocation5], 128, 128, 8
    $region9: #{hierarchical_mtl_forward.1} parent=1 // pred_fallthru
      _
    // Predicated region
    $region10: #{hierarchical_mtl_forward.1} parent=1 // pred_check
      _
    $region11: #{hierarchical_mtl_forward.1} parent=1 // pred_check_branch
      %36 = sbr.rel (0) target = $region13
    $region12: #{hierarchical_mtl_forward.1} parent=1 // pred_region
      %38 = dma.done [#allocation3], 256
    $region13: #{hierarchical_mtl_forward.1} parent=1 // pred_fallthru
      _
    // Predicated region
    $region14: #{hierarchical_mtl_forward.1} parent=1 // pred_check
      _
    $region15: #{hierarchical_mtl_forward.1} parent=1 // pred_check_branch
      %40 = sbr.rel (0) target = $region17
    $region16: #{hierarchical_mtl_forward.1} parent=1 // pred_region
      %42 = dma.done [#allocation5], 6784
    $region17: #{hierarchical_mtl_forward.1} parent=1 // pred_fallthru
      _
    %v43 = vld [vmem:[#allocation2] sm:$0x1]
    %v44 = vld [vmem:[#allocation2 + $0x8] sm:$0x1]
    %v45 = vmax.f32 %v43, -100.0
    %v46 = vmax.f32 %v44, -100.0
    %v47 = vmin.f32 %v45, 100.0
    %v48 = vmin.f32 %v46, 100.0
    %v49 = vlaneseq
    %v50 = vand.u32 %v49, 127
    %v51 = vld [vmem:[#allocation4] sm:$0xff]
    %v52 = vld [vmem:[#allocation4 + $0x8] sm:$0xff]
    %v53 = vld [vmem:[#allocation4 + $0x10] sm:$0xff]
    %v54 = vld [vmem:[#allocation4 + $0x18] sm:$0xff]
    %v55 = vld [vmem:[#allocation4 + $0x20] sm:$0x1]
    %v56 = vld [vmem:[#allocation4 + $0x21] sm:$0x1]
    %v57 = vld [vmem:[#allocation4 + $0x22] sm:$0x1]
    %v58 = vperm.slane %v55, 0
    %v61 = vrot.slane %v48, 7
    %vm62 = vcmask 1041409
    %v63 = vsel %vm62, %v61, %v47
    %vm64 = vcmask 261120
    %v65 = vsel %vm64, %v63, 0
    %67 = vmatpush.msra.mxu0 0.0
    %68 = vmatpush.msra.mxu0 0.0
    %69 = vmatpush.msra.mxu0 0.0
    %70 = vmatpush.msra.mxu0 0.0
    %71 = vmatpush.msra.mxu0 0.0
    %72 = vmatpush.msra.mxu0 0.0
    %73 = vmatpush.msra.mxu0 0.0
    %74 = vmatpush.msra.mxu0 0.0
    %75 = vmatpush.msra.mxu0 0.0
    %76 = vmatpush.msra.mxu0 0.0
    %77 = vmatpush.msra.mxu0 0.0
    %78 = vmatpush.msra.mxu0 0.0
    %79 = vmatpush.msra.mxu0 %v54
    %80 = vmatpush.msra.mxu0 %v53
    %81 = vmatpush.msra.mxu0 %v52
    %82 = vmatpush.msra.mxu0 %v51
    %83 = vmatmul.f32.gmra.mxu0 %v65
    %v84 = vpop.f32.mrf.mxu0
    %v85 = vadd.f32 %v58, %v84
    %86 = vdwg.mxu0
    %vm87 = vcmask 1041408
    %v88 = vsel %vm87, %v85, 0.0
    %89 = vadd.xlane.f32.xlu0 %v88
    %v90 = vpop.xlane.xlu0 %89
    %v91 = vmul.f32 %v90, 0.0625
    %vm92 = vcmp.lt.s32.totalorder %v50, 16
    %v93 = vsub.f32 %v85, %v91
    %v94 = vsel %vm92, 1, 0
    %vm95 = vcmp.eq.s32.totalorder %v94, 1
    %v96 = vsel %vm95, %v93, 0.0
    %v97 = vmul.f32 %v96, %v96
    %v98 = vsel %vm87, %v97, 0.0
    %99 = vadd.xlane.f32.xlu0 %v98
    %v100 = vpop.xlane.xlu0 %99
    %v101 = vmul.f32 %v100, 0.0625
    %v102 = vadd.f32 %v101, 1e-05
    %v103 = vrsqrt.pop %v102
    %v104 = vmul.f32 %v103, %v102
    %v105 = vmul.f32 %v104, %v103
    %v106 = vmul.f32 0.5, %v105
    %v107 = vsub.f32 1.5, %v106
    %v108 = vmul.f32 %v103, %v107
    %vm109 = vweird.f32 %v102
    %vm110 = vweird.f32 %v103
    %vm111 = vmor %vm109, %vm110
    %v112 = vsel %vm111, %v103, %v108
    %v113 = vmul.f32 %v96, %v112
    %v114 = vperm.slane %v56, 0
    %v115 = vmul.f32 %v113, %v114
    %v116 = vperm.slane %v57, 0
    %v117 = vadd.f32 %v115, %v116
    %v118 = vmax.f32 %v117, 0.0
    %v119 = vld [vmem:[#allocation4 + $0x23] sm:$0xff]
    %v120 = vld [vmem:[#allocation4 + $0x2b] sm:$0xff]
    %v121 = vld [vmem:[#allocation4 + $0x33] sm:$0xff]
    %v122 = vld [vmem:[#allocation4 + $0x3b] sm:$0xff]
    %v123 = vld [vmem:[#allocation4 + $0x43] sm:$0xff]
    %v124 = vld [vmem:[#allocation4 + $0x4b] sm:$0xff]
    %v125 = vld [vmem:[#allocation4 + $0x53] sm:$0xff]
    %v126 = vld [vmem:[#allocation4 + $0x5b] sm:$0xff]
    %v127 = vld [vmem:[#allocation4 + $0x63] sm:$0xff]
    %v128 = vld [vmem:[#allocation4 + $0x6b] sm:$0xff]
    %v129 = vld [vmem:[#allocation4 + $0x73] sm:$0xff]
    %v130 = vld [vmem:[#allocation4 + $0x7b] sm:$0xff]
    %v131 = vld [vmem:[#allocation4 + $0x83] sm:$0xff]
    %v132 = vld [vmem:[#allocation4 + $0x8b] sm:$0xff]
    %v133 = vld [vmem:[#allocation4 + $0x93] sm:$0xff]
    %v134 = vld [vmem:[#allocation4 + $0x9b] sm:$0xff]
    %v135 = vld [vmem:[#allocation4 + $0xa3] sm:$0x1]
    %v136 = vld [vmem:[#allocation4 + $0xa4] sm:$0x1]
    %v137 = vld [vmem:[#allocation4 + $0xa5] sm:$0x1]
    %v138 = vld [vmem:[#allocation4 + $0xa6] sm:$0xff]
    %v139 = vld [vmem:[#allocation4 + $0xae] sm:$0xff]
    %v140 = vld [vmem:[#allocation4 + $0xb6] sm:$0xff]
    %v141 = vld [vmem:[#allocation4 + $0xbe] sm:$0xff]
    %v142 = vld [vmem:[#allocation4 + $0xc6] sm:$0xff]
    %v143 = vld [vmem:[#allocation4 + $0xce] sm:$0xff]
    %v144 = vld [vmem:[#allocation4 + $0xd6] sm:$0xff]
    %v145 = vld [vmem:[#allocation4 + $0xde] sm:$0xff]
    %v146 = vld [vmem:[#allocation4 + $0xe6] sm:$0xff]
    %v147 = vld [vmem:[#allocation4 + $0xee] sm:$0xff]
    %v148 = vld [vmem:[#allocation4 + $0xf6] sm:$0xff]
    %v149 = vld [vmem:[#allocation4 + $0xfe] sm:$0xff]
    %v150 = vld [vmem:[#allocation4 + $0x106] sm:$0xff]
    %v151 = vld [vmem:[#allocation4 + $0x10e] sm:$0xff]
    %v152 = vld [vmem:[#allocation4 + $0x116] sm:$0xff]
    %v153 = vld [vmem:[#allocation4 + $0x11e] sm:$0xff]
    %v154 = vperm.slane %v135, 0
    %155 = vmatpush.msra.mxu0 %v134
    %156 = vmatpush.msra.mxu0 %v133
    %157 = vmatpush.msra.mxu0 %v132
    %158 = vmatpush.msra.mxu0 %v131
    %159 = vmatpush.msra.mxu0 %v130
    %160 = vmatpush.msra.mxu0 %v129
    %161 = vmatpush.msra.mxu0 %v128
    %162 = vmatpush.msra.mxu0 %v127
    %163 = vmatpush.msra.mxu0 %v126
    %164 = vmatpush.msra.mxu0 %v125
    %165 = vmatpush.msra.mxu0 %v124
    %166 = vmatpush.msra.mxu0 %v123
    %167 = vmatpush.msra.mxu0 %v122
    %168 = vmatpush.msra.mxu0 %v121
    %169 = vmatpush.msra.mxu0 %v120
    %170 = vmatpush.msra.mxu0 %v119
    %171 = vmatmul.f32.gmra.mxu0 %v118
    %v172 = vpop.f32.mrf.mxu0
    %v173 = vadd.f32 %v154, %v172
    %174 = vdwg.mxu0
    %175 = vmatpush.msra.mxu0 %v153
    %176 = vmatpush.msra.mxu0 %v152
    %177 = vmatpush.msra.mxu0 %v151
    %178 = vmatpush.msra.mxu0 %v150
    %179 = vmatpush.msra.mxu0 %v149
    %180 = vmatpush.msra.mxu0 %v148
    %181 = vmatpush.msra.mxu0 %v147
    %182 = vmatpush.msra.mxu0 %v146
    %183 = vmatpush.msra.mxu0 %v145
    %184 = vmatpush.msra.mxu0 %v144
    %185 = vmatpush.msra.mxu0 %v143
    %186 = vmatpush.msra.mxu0 %v142
    %187 = vmatpush.msra.mxu0 %v141
    %188 = vmatpush.msra.mxu0 %v140
    %189 = vmatpush.msra.mxu0 %v139
    %190 = vmatpush.msra.mxu0 %v138
    %191 = vmatmul.f32.gmra.mxu0 %v173
    %v192 = vpop.f32.mrf.mxu0
    %v193 = vadd.f32 0.0, %v192
    %194 = vdwg.mxu0
    %v195 = vsub.f32 %v173, %v193
    %v196 = vmul.f32 %v195, %v195
    %197 = vmatpush.msra.mxu0 %v153
    %198 = vmatpush.msra.mxu0 %v152
    %199 = vmatpush.msra.mxu0 %v151
    %200 = vmatpush.msra.mxu0 %v150
    %201 = vmatpush.msra.mxu0 %v149
    %202 = vmatpush.msra.mxu0 %v148
    %203 = vmatpush.msra.mxu0 %v147
    %204 = vmatpush.msra.mxu0 %v146
    %205 = vmatpush.msra.mxu0 %v145
    %206 = vmatpush.msra.mxu0 %v144
    %207 = vmatpush.msra.mxu0 %v143
    %208 = vmatpush.msra.mxu0 %v142
    %209 = vmatpush.msra.mxu0 %v141
    %210 = vmatpush.msra.mxu0 %v140
    %211 = vmatpush.msra.mxu0 %v139
    %212 = vmatpush.msra.mxu0 %v138
    %213 = vmatmul.f32.gmra.mxu0 %v196
    %v214 = vpop.f32.mrf.mxu0
    %v215 = vadd.f32 1e-05, %v214
    %216 = vdwg.mxu0
    %v217 = vrsqrt.pop %v215
    %v218 = vmul.f32 %v217, %v215
    %v219 = vmul.f32 %v218, %v217
    %v220 = vmul.f32 0.5, %v219
    %v221 = vsub.f32 1.5, %v220
    %v222 = vmul.f32 %v217, %v221
    %vm223 = vweird.f32 %v215
    %vm224 = vweird.f32 %v217
    %vm225 = vmor %vm223, %vm224
    %v226 = vsel %vm225, %v217, %v222
    %v227 = vmul.f32 %v195, %v226
    %v228 = vperm.slane %v136, 0
    %v229 = vmul.f32 %v227, %v228
    %v230 = vperm.slane %v137, 0
    %v231 = vadd.f32 %v229, %v230
    %v232 = vmax.f32 %v231, 0.0
    %v233 = vld [vmem:[#allocation4 + $0x126] sm:$0xff]
    %v234 = vld [vmem:[#allocation4 + $0x12e] sm:$0xff]
    %v235 = vld [vmem:[#allocation4 + $0x136] sm:$0xff]
    %v236 = vld [vmem:[#allocation4 + $0x13e] sm:$0xff]
    %v237 = vld [vmem:[#allocation4 + $0x146] sm:$0xff]
    %v238 = vld [vmem:[#allocation4 + $0x14e] sm:$0xff]
    %v239 = vld [vmem:[#allocation4 + $0x156] sm:$0xff]
    %v240 = vld [vmem:[#allocation4 + $0x15e] sm:$0xff]
    %v241 = vld [vmem:[#allocation4 + $0x166] sm:$0xff]
    %v242 = vld [vmem:[#allocation4 + $0x16e] sm:$0xff]
    %v243 = vld [vmem:[#allocation4 + $0x176] sm:$0xff]
    %v244 = vld [vmem:[#allocation4 + $0x17e] sm:$0xff]
    %v245 = vld [vmem:[#allocation4 + $0x186] sm:$0xff]
    %v246 = vld [vmem:[#allocation4 + $0x18e] sm:$0xff]
    %v247 = vld [vmem:[#allocation4 + $0x196] sm:$0xff]
    %v248 = vld [vmem:[#allocation4 + $0x19e] sm:$0xff]
    %v249 = vld [vmem:[#allocation4 + $0x1a6] sm:$0x1]
    %v250 = vperm.slane %v249, 0
    %251 = vmatpush.msra.mxu0 %v248
    %252 = vmatpush.msra.mxu0 %v247
    %253 = vmatpush.msra.mxu0 %v246
    %254 = vmatpush.msra.mxu0 %v245
    %255 = vmatpush.msra.mxu0 %v244
    %256 = vmatpush.msra.mxu0 %v243
    %257 = vmatpush.msra.mxu0 %v242
    %258 = vmatpush.msra.mxu0 %v241
    %259 = vmatpush.msra.mxu0 %v240
    %260 = vmatpush.msra.mxu0 %v239
    %261 = vmatpush.msra.mxu0 %v238
    %262 = vmatpush.msra.mxu0 %v237
    %263 = vmatpush.msra.mxu0 %v236
    %264 = vmatpush.msra.mxu0 %v235
    %265 = vmatpush.msra.mxu0 %v234
    %266 = vmatpush.msra.mxu0 %v233
    %267 = vmatmul.f32.gmra.mxu0 %v232
    %v268 = vpop.f32.mrf.mxu0
    %v269 = vadd.f32 %v250, %v268
    %270 = vdwg.mxu0
    %271 = vst [vmem:[%s2] sm:$0x3] %v269
    // Predicated region
    $region18: #{hierarchical_mtl_forward.1} parent=1 // pred_check
      _
    $region19: #{hierarchical_mtl_forward.1} parent=1 // pred_check_branch
      %273 = sbr.rel (0) target = $region21
    $region20: #{hierarchical_mtl_forward.1} parent=1 // pred_region
      _
    $region21: #{hierarchical_mtl_forward.1} parent=1 // pred_fallthru
      _
    // Predicated region
    $region22: #{hierarchical_mtl_forward.1} parent=1 // pred_check
      _
    $region23: #{hierarchical_mtl_forward.1} parent=1 // pred_check_branch
      %275 = sbr.rel (0) target = $region25
    $region24: #{hierarchical_mtl_forward.1} parent=1 // pred_region
      _
    $region25: #{hierarchical_mtl_forward.1} parent=1 // pred_fallthru
      _
    %276 = vsyncpa [#allocation3], 1
    %277 = vsyncpa [#allocation5], 1

</llo_original>
